<compile_context>
chip_gen: v5e
topology: v5e:2x2
jax: 0.10.0
libtpu: 0.0.40
codegen_flags: <defaults>
</compile_context>

<pallas_src>
import functools

import jax
import jax.numpy as jnp
from jax.experimental import pallas as pl
from jax.experimental.pallas import tpu as pltpu


def _round_up(x, m):
    return ((x + m - 1) // m) * m


def _vmem_limit_bytes():
    cap = 64 * 1024 * 1024
    try:
        cap = int(getattr(pltpu.get_tpu_info(), "vmem_capacity_bytes", cap))
    except Exception:
        pass
    # Leave headroom for compiler scratch: v7x (64 MiB/TC) -> 48 MiB,
    # v5e/v6e (128 MiB) -> 96 MiB (well above the 16/32 MiB scoped defaults).
    return min((cap * 3) // 4, 100 * 1024 * 1024)


_VMEM_LIMIT = _vmem_limit_bytes()


def _choose_tiling(B, C, Op, Tp, budget_bytes):
    """Pick (bt, Bp): batch tile (multiple of 8) sized to the VMEM budget and
    padded batch Bp, with >= 2 grid steps whenever B > 1 (v7x has 2 TCs)."""

    def fits(bt):
        x_blk = C * bt * Tp * 2                       # bf16 x block
        out_blk = 2 * Op * bt * Tp * 4 + bt * Op * 4  # norm_att + cla + pooled (f32)
        w_blk = 2 * Op * C * 2 + 2 * Op * 4           # fused weight (bf16) + bias
        scratch = 3 * Op * bt * Tp * 4                # y_scratch + pooled temporaries
        slack = 2 * 1024 * 1024
        # inputs/outputs/weights double-buffered by the pipeline -> factor 2
        return 2 * (x_blk + out_blk + w_blk) + scratch + slack <= budget_bytes

    bt = 8
    while fits(bt * 2) and bt * 2 <= _round_up(B, 8):
        bt *= 2
    # TODO(synk): if even bt=8 overflows VMEM (huge C*T), add an inner
    # "arbitrary" grid axis over the C contraction with a VMEM accumulator.
    if B > 1:
        # keep at least 2 grid steps so both v7x TensorCores get work
        bt = min(bt, max(8, _round_up((B + 1) // 2, 8)))
        n_steps = max(2, -(-B // bt))
    else:
        n_steps = -(-B // bt)
    return bt, n_steps * bt


def _att_block_kernel(x_ref, w_ref, b_ref, pooled_ref, norm_att_ref, cla_ref,
                      y_scratch, *, o_pad, bt, t_pad, t_valid, activation):
    """x_ref: (C, bt*Tp) bf16; w_ref: (2*Op, C) bf16; b_ref: (2*Op, 1) f32.

    Outputs: pooled (bt, Op) f32; norm_att, cla (bt, Op, Tp) f32.
    Scratch: y_scratch (2*Op, bt*Tp) f32.
    """
    # One wide MXU matmul for the whole batch tile (f32 accumulation), bias
    # broadcast exactly once over the full (2*Op, bt*Tp) result.
    y = jnp.dot(w_ref[...], x_ref[...], preferred_element_type=jnp.float32)
    y_scratch[...] = y + b_ref[...]

    if t_valid < t_pad:
        t_mask = jax.lax.broadcasted_iota(jnp.int32, (1, t_pad), 1) < t_valid
    else:
        t_mask = None

    def body(b, carry):
        off = pl.multiple_of(b * t_pad, 128)          # lane-aligned column block
        att = jnp.tanh(y_scratch[pl.ds(0, o_pad), pl.ds(off, t_pad)])
        cla = y_scratch[pl.ds(o_pad, o_pad), pl.ds(off, t_pad)]
        if activation == 'sigmoid':
            cla = jax.nn.sigmoid(cla)
        # activation == 'linear' -> identity (matches nonlinear_transform)

        if t_mask is not None:                        # padded time columns -> 0 prob
            att = jnp.where(t_mask, att, -jnp.inf)

        # numerically stable softmax over the (lane) time axis; the approx
        # reciprocal runs on the EUP slot instead of a VALU divide.
        m = jnp.max(att, axis=-1, keepdims=True)
        e = jnp.exp(att - m)
        inv = pl.reciprocal(jnp.sum(e, axis=-1, keepdims=True), approx=True)

        norm_att_ref[b] = e * inv                     # (Op, Tp)
        cla_ref[b] = cla
        return carry

    jax.lax.fori_loop(0, bt, body, 0, unroll=(bt <= 16))

    # Attention pooling from the VMEM-resident output blocks: padded time
    # columns contribute 0 (norm_att == 0 there). Single lane-dense store.
    pooled_ref[...] = jnp.sum(norm_att_ref[...] * cla_ref[...], axis=-1)


@functools.partial(jax.jit, static_argnames=('activation',))
def att_block_v2(x, att_w, att_b, cla_w, cla_b, activation='linear'):
    """x: (B, C_in, T); att_w/cla_w: (O, C_in); att_b/cla_b: (O,).

    Returns (pooled (B, O), norm_att (B, O, T), cla (B, O, T)), matching
    torch AttBlockV2.forward.
    """
    if activation not in ('linear', 'sigmoid'):
        raise ValueError(f"unsupported activation: {activation!r}")

    B, C, T = x.shape
    O = att_w.shape[0]

    Op = _round_up(O, 8)      # sublane-aligned att/cla split of the fused matmul
    Tp = _round_up(T, 128)    # lane-dense time axis
    bt, Bp = _choose_tiling(B, C, Op, Tp, _VMEM_LIMIT)
    n_steps = Bp // bt

    # Fused + padded weights/bias: att rows stacked on top of cla rows.
    def pad_w(w_):
        return jnp.pad(w_.astype(jnp.float32), ((0, Op - O), (0, 0)))

    def pad_b(b_):
        return jnp.pad(b_.astype(jnp.float32), ((0, Op - O),))

    w = jnp.concatenate([pad_w(att_w), pad_w(cla_w)], axis=0).astype(jnp.bfloat16)
    bias = jnp.concatenate([pad_b(att_b), pad_b(cla_b)], axis=0).reshape(2 * Op, 1)

    # x: (B, C, T) -> (C, Bp*Tp) bf16 with batch/time zero-padding; each batch
    # element owns a contiguous, 128-aligned block of Tp lanes.
    xt = jnp.transpose(x.astype(jnp.float32), (1, 0, 2))       # (C, B, T)
    xt = jnp.pad(xt, ((0, 0), (0, Bp - B), (0, Tp - T)))
    x_flat = xt.reshape(C, Bp * Tp).astype(jnp.bfloat16)

    kernel = functools.partial(_att_block_kernel, o_pad=Op, bt=bt,
                               t_pad=Tp, t_valid=T, activation=activation)

    flops = 2 * (2 * Op) * C * Bp * Tp
    bytes_accessed = (x_flat.size * 2 + w.size * 2 + bias.size * 4
                      + (Bp * Op + 2 * Bp * Op * Tp) * 4)

    pooled_p, norm_att_p, cla_p = pl.pallas_call(
        kernel,
        out_shape=(
            jax.ShapeDtypeStruct((Bp, Op), jnp.float32),
            jax.ShapeDtypeStruct((Bp, Op, Tp), jnp.float32),
            jax.ShapeDtypeStruct((Bp, Op, Tp), jnp.float32),
        ),
        grid_spec=pltpu.PrefetchScalarGridSpec(
            num_scalar_prefetch=0,
            grid=(n_steps,),
            in_specs=[
                pl.BlockSpec((C, bt * Tp), lambda i: (0, i)),   # x batch-tile
                pl.BlockSpec((2 * Op, C), lambda i: (0, 0)),    # fused weight (DMA'd once)
                pl.BlockSpec((2 * Op, 1), lambda i: (0, 0)),    # fused bias
            ],
            out_specs=(
                pl.BlockSpec((bt, Op), lambda i: (i, 0)),       # pooled
                pl.BlockSpec((bt, Op, Tp), lambda i: (i, 0, 0)),  # norm_att
                pl.BlockSpec((bt, Op, Tp), lambda i: (i, 0, 0)),  # cla
            ),
            scratch_shapes=[pltpu.VMEM((2 * Op, bt * Tp), jnp.float32)],
        ),
        compiler_params=pltpu.CompilerParams(
            # every output block is written exactly once per step -> batch axis
            # can be sharded across TensorCores (2 TCs on v7x)
            dimension_semantics=("parallel",),
            vmem_limit_bytes=_VMEM_LIMIT,
        ),
        cost_estimate=pl.CostEstimate(
            flops=flops,
            transcendentals=2 * Bp * Op * Tp,
            bytes_accessed=bytes_accessed,
        ),
    )(x_flat, w, bias)

    # Outputs are already (batch, out, time); just strip batch/O/T padding.
    pooled = pooled_p[:B, :O]
    norm_att = norm_att_p[:B, :O, :T]
    cla = cla_p[:B, :O, :T]
    return pooled, norm_att, cla


def _xavier_uniform_conv1d(key, out_features, in_features):
    # torch Conv1d weight (O, C, 1); xavier bound = sqrt(6/(fan_in+fan_out))
    bound = (6.0 / (in_features + out_features)) ** 0.5
    return jax.random.uniform(key, (out_features, in_features),
                              minval=-bound, maxval=bound, dtype=jnp.float32)


if __name__ == "__main__":
    B, C_IN, T, C_OUT = 2, 32, 16, 8

    key = jax.random.PRNGKey(0)
    kx, kw_att, kw_cla = jax.random.split(key, 3)

    x = jax.random.normal(kx, (B, C_IN, T), dtype=jnp.float32)
    att_w = _xavier_uniform_conv1d(kw_att, C_OUT, C_IN)
    cla_w = _xavier_uniform_conv1d(kw_cla, C_OUT, C_IN)
    att_b = jnp.zeros((C_OUT,), jnp.float32)   # init_layer: bias.fill_(0.0)
    cla_b = jnp.zeros((C_OUT,), jnp.float32)

    for act in ('linear', 'sigmoid'):
        pooled, norm_att, cla = att_block_v2(x, att_w, att_b, cla_w, cla_b,
                                             activation=act)
        jax.block_until_ready((pooled, norm_att, cla))

        # pure-JAX f32 reference (same math as the torch forward)
        att_ref = jnp.einsum('oc,bct->bot', att_w, x) + att_b[None, :, None]
        norm_att_ref = jax.nn.softmax(jnp.tanh(att_ref), axis=-1)
        cla_ref = jnp.einsum('oc,bct->bot', cla_w, x) + cla_b[None, :, None]
        if act == 'sigmoid':
            cla_ref = jax.nn.sigmoid(cla_ref)
        pooled_ref = jnp.sum(norm_att_ref * cla_ref, axis=2)

        assert pooled.shape == (B, C_OUT)
        assert norm_att.shape == (B, C_OUT, T)
        assert cla.shape == (B, C_OUT, T)
        # tolerance relaxed vs 1e-5: matmul inputs are bf16 and the softmax
        # denominator uses the hardware approximate reciprocal (EUP)
        assert jnp.allclose(pooled, pooled_ref, atol=2e-2, rtol=2e-2), act
        assert jnp.allclose(norm_att, norm_att_ref, atol=2e-2, rtol=2e-2), act
        assert jnp.allclose(cla, cla_ref, atol=2e-2, rtol=2e-2), act

    print("KERNEL_OK")
</pallas_src>

<mosaic_0001>
module attributes {stable_mosaic.version = 11 : i64} {
  func.func @_att_block_kernel(%arg0: i32, %arg1: memref<32x1024xbf16, #tpu.memory_space<vmem>>, %arg2: memref<16x32xbf16, #tpu.memory_space<vmem>>, %arg3: memref<16x1xf32, #tpu.memory_space<vmem>>, %arg4: memref<8x8xf32, #tpu.memory_space<vmem>>, %arg5: memref<8x8x128xf32, #tpu.memory_space<vmem>>, %arg6: memref<8x8x128xf32, #tpu.memory_space<vmem>>, %arg7: memref<16x1024xf32, #tpu.memory_space<vmem>>) attributes {dimension_semantics = [#tpu.dimension_semantics<parallel>], iteration_bounds = array<i64: 2>, scalar_prefetch = 0 : i64, scratch_operands = 1 : i64, tpu.core_type = #tpu.core_type<tc>, window_params = [{transform_indices = @transform_0, window_bounds = array<i64: 32, 1024>}, {pipeline_mode = #tpu.pipeline_mode<synchronous>, transform_indices = @transform_1, window_bounds = array<i64: 16, 32>}, {pipeline_mode = #tpu.pipeline_mode<synchronous>, transform_indices = @transform_2, window_bounds = array<i64: 16, 1>}, {transform_indices = @transform_3, window_bounds = array<i64: 8, 8>}, {transform_indices = @transform_4, window_bounds = array<i64: 8, 8, 128>}, {transform_indices = @transform_5, window_bounds = array<i64: 8, 8, 128>}]} {
    %c0 = arith.constant 0 : index
    %c0_0 = arith.constant 0 : index
    %0 = vector.load %arg2[%c0, %c0_0] : memref<16x32xbf16, #tpu.memory_space<vmem>>, vector<16x32xbf16>
    %c0_1 = arith.constant 0 : index
    %c0_2 = arith.constant 0 : index
    %1 = vector.load %arg1[%c0_1, %c0_2] : memref<32x1024xbf16, #tpu.memory_space<vmem>>, vector<32x1024xbf16>
    %cst = arith.constant dense<0.000000e+00> : vector<16x1024xf32>
    %2 = tpu.matmul %0, %1, %cst {dimension_numbers = #tpu.dot_dimension_numbers<[1], [0], [0], [1], [0, 0, 1, 1], [], []>} : vector<16x32xbf16>, vector<32x1024xbf16>, vector<16x1024xf32> -> vector<16x1024xf32>
    %c0_3 = arith.constant 0 : index
    %c0_4 = arith.constant 0 : index
    %3 = vector.load %arg3[%c0_3, %c0_4] : memref<16x1xf32, #tpu.memory_space<vmem>>, vector<16x1xf32>
    %4 = vector.broadcast %3 : vector<16x1xf32> to vector<16x1024xf32>
    %5 = arith.addf %2, %4 : vector<16x1024xf32>
    %c0_5 = arith.constant 0 : index
    %c0_6 = arith.constant 0 : index
    %6 = vector.load %arg7[%c0_5, %c0_6] : memref<16x1024xf32, #tpu.memory_space<vmem>>, vector<16x1024xf32>
    tpu.vector_store %arg7[%c0_5, %c0_6], %5 {strides = array<i32>} : memref<16x1024xf32, #tpu.memory_space<vmem>>, vector<16x1024xf32>,
    %7 = tpu.iota {dimensions = array<i32: 1>} : vector<1x128xi32>
    %c16_i32 = arith.constant 16 : i32
    %8 = vector.broadcast %c16_i32 : i32 to vector<1x128xi32>
    %9 = arith.cmpi slt, %7, %8 : vector<1x128xi32>
    %c0_i32 = arith.constant 0 : i32
    %c128_i32 = arith.constant 128 : i32
    %10 = arith.muli %c0_i32, %c128_i32 : i32
    %11 = tpu.assume_multiple %10, 128 : i32
    %c0_7 = arith.constant 0 : index
    %12 = arith.index_cast %11 : i32 to index
    %13 = vector.load %arg7[%c0_7, %12] : memref<16x1024xf32, #tpu.memory_space<vmem>>, vector<8x128xf32>
    %14 = math.tanh %13 : vector<8x128xf32>
    %c8 = arith.constant 8 : index
    %15 = arith.index_cast %11 : i32 to index
    %16 = vector.load %arg7[%c8, %15] : memref<16x1024xf32, #tpu.memory_space<vmem>>, vector<8x128xf32>
    %cst_8 = arith.constant 0xFF800000 : f32
    %17 = vector.shape_cast %9 : vector<1x128xi1> to vector<1x128xi1>
    %18 = vector.broadcast %17 : vector<1x128xi1> to vector<8x128xi1>
    %19 = vector.broadcast %cst_8 : f32 to vector<8x128xf32>
    %20 = arith.select %18, %14, %19 : vector<8x128xi1>, vector<8x128xf32>
    %cst_9 = arith.constant dense<0xFF800000> : vector<8xf32>
    %21 = vector.multi_reduction <maximumf>, %20, %cst_9 [1] : vector<8x128xf32> to vector<8xf32>
    %22 = vector.shape_cast %21 : vector<8xf32> to vector<8x1xf32>
    %23 = vector.broadcast %22 : vector<8x1xf32> to vector<8x128xf32>
    %24 = arith.subf %20, %23 : vector<8x128xf32>
    %25 = math.exp %24 : vector<8x128xf32>
    %cst_10 = arith.constant dense<0.000000e+00> : vector<8xf32>
    %26 = vector.multi_reduction <add>, %25, %cst_10 [1] : vector<8x128xf32> to vector<8xf32>
    %27 = vector.shape_cast %26 : vector<8xf32> to vector<8x1xf32>
    %28 = tpu.reciprocal %27 {approx = true} : vector<8x1xf32> -> vector<8x1xf32>
    %29 = vector.broadcast %28 : vector<8x1xf32> to vector<8x128xf32>
    %30 = arith.mulf %25, %29 : vector<8x128xf32>
    %31 = arith.index_cast %c0_i32 : i32 to index
    %c0_11 = arith.constant 0 : index
    %c0_12 = arith.constant 0 : index
    %32 = vector.load %arg5[%31, %c0_11, %c0_12] : memref<8x8x128xf32, #tpu.memory_space<vmem>>, vector<1x8x128xf32>
    %33 = vector.shape_cast %32 : vector<1x8x128xf32> to vector<8x128xf32>
    %34 = vector.shape_cast %30 : vector<8x128xf32> to vector<1x8x128xf32>
    tpu.vector_store %arg5[%31, %c0_11, %c0_12], %34 {strides = array<i32>} : memref<8x8x128xf32, #tpu.memory_space<vmem>>, vector<1x8x128xf32>,
    %35 = arith.index_cast %c0_i32 : i32 to index
    %c0_13 = arith.constant 0 : index
    %c0_14 = arith.constant 0 : index
    %36 = vector.load %arg6[%35, %c0_13, %c0_14] : memref<8x8x128xf32, #tpu.memory_space<vmem>>, vector<1x8x128xf32>
    %37 = vector.shape_cast %36 : vector<1x8x128xf32> to vector<8x128xf32>
    %38 = vector.shape_cast %16 : vector<8x128xf32> to vector<1x8x128xf32>
    tpu.vector_store %arg6[%35, %c0_13, %c0_14], %38 {strides = array<i32>} : memref<8x8x128xf32, #tpu.memory_space<vmem>>, vector<1x8x128xf32>,
    %c1_i32 = arith.constant 1 : i32
    %c128_i32_15 = arith.constant 128 : i32
    %39 = arith.muli %c1_i32, %c128_i32_15 : i32
    %40 = tpu.assume_multiple %39, 128 : i32
    %c0_16 = arith.constant 0 : index
    %41 = arith.index_cast %40 : i32 to index
    %42 = vector.load %arg7[%c0_16, %41] : memref<16x1024xf32, #tpu.memory_space<vmem>>, vector<8x128xf32>
    %43 = math.tanh %42 : vector<8x128xf32>
    %c8_17 = arith.constant 8 : index
    %44 = arith.index_cast %40 : i32 to index
    %45 = vector.load %arg7[%c8_17, %44] : memref<16x1024xf32, #tpu.memory_space<vmem>>, vector<8x128xf32>
    %cst_18 = arith.constant 0xFF800000 : f32
    %46 = vector.shape_cast %9 : vector<1x128xi1> to vector<1x128xi1>
    %47 = vector.broadcast %46 : vector<1x128xi1> to vector<8x128xi1>
    %48 = vector.broadcast %cst_18 : f32 to vector<8x128xf32>
    %49 = arith.select %47, %43, %48 : vector<8x128xi1>, vector<8x128xf32>
    %cst_19 = arith.constant dense<0xFF800000> : vector<8xf32>
    %50 = vector.multi_reduction <maximumf>, %49, %cst_19 [1] : vector<8x128xf32> to vector<8xf32>
    %51 = vector.shape_cast %50 : vector<8xf32> to vector<8x1xf32>
    %52 = vector.broadcast %51 : vector<8x1xf32> to vector<8x128xf32>
    %53 = arith.subf %49, %52 : vector<8x128xf32>
    %54 = math.exp %53 : vector<8x128xf32>
    %cst_20 = arith.constant dense<0.000000e+00> : vector<8xf32>
    %55 = vector.multi_reduction <add>, %54, %cst_20 [1] : vector<8x128xf32> to vector<8xf32>
    %56 = vector.shape_cast %55 : vector<8xf32> to vector<8x1xf32>
    %57 = tpu.reciprocal %56 {approx = true} : vector<8x1xf32> -> vector<8x1xf32>
    %58 = vector.broadcast %57 : vector<8x1xf32> to vector<8x128xf32>
    %59 = arith.mulf %54, %58 : vector<8x128xf32>
    %60 = arith.index_cast %c1_i32 : i32 to index
    %c0_21 = arith.constant 0 : index
    %c0_22 = arith.constant 0 : index
    %61 = vector.load %arg5[%60, %c0_21, %c0_22] : memref<8x8x128xf32, #tpu.memory_space<vmem>>, vector<1x8x128xf32>
    %62 = vector.shape_cast %61 : vector<1x8x128xf32> to vector<8x128xf32>
    %63 = vector.shape_cast %59 : vector<8x128xf32> to vector<1x8x128xf32>
    tpu.vector_store %arg5[%60, %c0_21, %c0_22], %63 {strides = array<i32>} : memref<8x8x128xf32, #tpu.memory_space<vmem>>, vector<1x8x128xf32>,
    %64 = arith.index_cast %c1_i32 : i32 to index
    %c0_23 = arith.constant 0 : index
    %c0_24 = arith.constant 0 : index
    %65 = vector.load %arg6[%64, %c0_23, %c0_24] : memref<8x8x128xf32, #tpu.memory_space<vmem>>, vector<1x8x128xf32>
    %66 = vector.shape_cast %65 : vector<1x8x128xf32> to vector<8x128xf32>
    %67 = vector.shape_cast %45 : vector<8x128xf32> to vector<1x8x128xf32>
    tpu.vector_store %arg6[%64, %c0_23, %c0_24], %67 {strides = array<i32>} : memref<8x8x128xf32, #tpu.memory_space<vmem>>, vector<1x8x128xf32>,
    %c2_i32 = arith.constant 2 : i32
    %c128_i32_25 = arith.constant 128 : i32
    %68 = arith.muli %c2_i32, %c128_i32_25 : i32
    %69 = tpu.assume_multiple %68, 128 : i32
    %c0_26 = arith.constant 0 : index
    %70 = arith.index_cast %69 : i32 to index
    %71 = vector.load %arg7[%c0_26, %70] : memref<16x1024xf32, #tpu.memory_space<vmem>>, vector<8x128xf32>
    %72 = math.tanh %71 : vector<8x128xf32>
    %c8_27 = arith.constant 8 : index
    %73 = arith.index_cast %69 : i32 to index
    %74 = vector.load %arg7[%c8_27, %73] : memref<16x1024xf32, #tpu.memory_space<vmem>>, vector<8x128xf32>
    %cst_28 = arith.constant 0xFF800000 : f32
    %75 = vector.shape_cast %9 : vector<1x128xi1> to vector<1x128xi1>
    %76 = vector.broadcast %75 : vector<1x128xi1> to vector<8x128xi1>
    %77 = vector.broadcast %cst_28 : f32 to vector<8x128xf32>
    %78 = arith.select %76, %72, %77 : vector<8x128xi1>, vector<8x128xf32>
    %cst_29 = arith.constant dense<0xFF800000> : vector<8xf32>
    %79 = vector.multi_reduction <maximumf>, %78, %cst_29 [1] : vector<8x128xf32> to vector<8xf32>
    %80 = vector.shape_cast %79 : vector<8xf32> to vector<8x1xf32>
    %81 = vector.broadcast %80 : vector<8x1xf32> to vector<8x128xf32>
    %82 = arith.subf %78, %81 : vector<8x128xf32>
    %83 = math.exp %82 : vector<8x128xf32>
    %cst_30 = arith.constant dense<0.000000e+00> : vector<8xf32>
    %84 = vector.multi_reduction <add>, %83, %cst_30 [1] : vector<8x128xf32> to vector<8xf32>
    %85 = vector.shape_cast %84 : vector<8xf32> to vector<8x1xf32>
    %86 = tpu.reciprocal %85 {approx = true} : vector<8x1xf32> -> vector<8x1xf32>
    %87 = vector.broadcast %86 : vector<8x1xf32> to vector<8x128xf32>
    %88 = arith.mulf %83, %87 : vector<8x128xf32>
    %89 = arith.index_cast %c2_i32 : i32 to index
    %c0_31 = arith.constant 0 : index
    %c0_32 = arith.constant 0 : index
    %90 = vector.load %arg5[%89, %c0_31, %c0_32] : memref<8x8x128xf32, #tpu.memory_space<vmem>>, vector<1x8x128xf32>
    %91 = vector.shape_cast %90 : vector<1x8x128xf32> to vector<8x128xf32>
    %92 = vector.shape_cast %88 : vector<8x128xf32> to vector<1x8x128xf32>
    tpu.vector_store %arg5[%89, %c0_31, %c0_32], %92 {strides = array<i32>} : memref<8x8x128xf32, #tpu.memory_space<vmem>>, vector<1x8x128xf32>,
    %93 = arith.index_cast %c2_i32 : i32 to index
    %c0_33 = arith.constant 0 : index
    %c0_34 = arith.constant 0 : index
    %94 = vector.load %arg6[%93, %c0_33, %c0_34] : memref<8x8x128xf32, #tpu.memory_space<vmem>>, vector<1x8x128xf32>
    %95 = vector.shape_cast %94 : vector<1x8x128xf32> to vector<8x128xf32>
    %96 = vector.shape_cast %74 : vector<8x128xf32> to vector<1x8x128xf32>
    tpu.vector_store %arg6[%93, %c0_33, %c0_34], %96 {strides = array<i32>} : memref<8x8x128xf32, #tpu.memory_space<vmem>>, vector<1x8x128xf32>,
    %c3_i32 = arith.constant 3 : i32
    %c128_i32_35 = arith.constant 128 : i32
    %97 = arith.muli %c3_i32, %c128_i32_35 : i32
    %98 = tpu.assume_multiple %97, 128 : i32
    %c0_36 = arith.constant 0 : index
    %99 = arith.index_cast %98 : i32 to index
    %100 = vector.load %arg7[%c0_36, %99] : memref<16x1024xf32, #tpu.memory_space<vmem>>, vector<8x128xf32>
    %101 = math.tanh %100 : vector<8x128xf32>
    %c8_37 = arith.constant 8 : index
    %102 = arith.index_cast %98 : i32 to index
    %103 = vector.load %arg7[%c8_37, %102] : memref<16x1024xf32, #tpu.memory_space<vmem>>, vector<8x128xf32>
    %cst_38 = arith.constant 0xFF800000 : f32
    %104 = vector.shape_cast %9 : vector<1x128xi1> to vector<1x128xi1>
    %105 = vector.broadcast %104 : vector<1x128xi1> to vector<8x128xi1>
    %106 = vector.broadcast %cst_38 : f32 to vector<8x128xf32>
    %107 = arith.select %105, %101, %106 : vector<8x128xi1>, vector<8x128xf32>
    %cst_39 = arith.constant dense<0xFF800000> : vector<8xf32>
    %108 = vector.multi_reduction <maximumf>, %107, %cst_39 [1] : vector<8x128xf32> to vector<8xf32>
    %109 = vector.shape_cast %108 : vector<8xf32> to vector<8x1xf32>
    %110 = vector.broadcast %109 : vector<8x1xf32> to vector<8x128xf32>
    %111 = arith.subf %107, %110 : vector<8x128xf32>
    %112 = math.exp %111 : vector<8x128xf32>
    %cst_40 = arith.constant dense<0.000000e+00> : vector<8xf32>
    %113 = vector.multi_reduction <add>, %112, %cst_40 [1] : vector<8x128xf32> to vector<8xf32>
    %114 = vector.shape_cast %113 : vector<8xf32> to vector<8x1xf32>
    %115 = tpu.reciprocal %114 {approx = true} : vector<8x1xf32> -> vector<8x1xf32>
    %116 = vector.broadcast %115 : vector<8x1xf32> to vector<8x128xf32>
    %117 = arith.mulf %112, %116 : vector<8x128xf32>
    %118 = arith.index_cast %c3_i32 : i32 to index
    %c0_41 = arith.constant 0 : index
    %c0_42 = arith.constant 0 : index
    %119 = vector.load %arg5[%118, %c0_41, %c0_42] : memref<8x8x128xf32, #tpu.memory_space<vmem>>, vector<1x8x128xf32>
    %120 = vector.shape_cast %119 : vector<1x8x128xf32> to vector<8x128xf32>
    %121 = vector.shape_cast %117 : vector<8x128xf32> to vector<1x8x128xf32>
    tpu.vector_store %arg5[%118, %c0_41, %c0_42], %121 {strides = array<i32>} : memref<8x8x128xf32, #tpu.memory_space<vmem>>, vector<1x8x128xf32>,
    %122 = arith.index_cast %c3_i32 : i32 to index
    %c0_43 = arith.constant 0 : index
    %c0_44 = arith.constant 0 : index
    %123 = vector.load %arg6[%122, %c0_43, %c0_44] : memref<8x8x128xf32, #tpu.memory_space<vmem>>, vector<1x8x128xf32>
    %124 = vector.shape_cast %123 : vector<1x8x128xf32> to vector<8x128xf32>
    %125 = vector.shape_cast %103 : vector<8x128xf32> to vector<1x8x128xf32>
    tpu.vector_store %arg6[%122, %c0_43, %c0_44], %125 {strides = array<i32>} : memref<8x8x128xf32, #tpu.memory_space<vmem>>, vector<1x8x128xf32>,
    %c4_i32 = arith.constant 4 : i32
    %c128_i32_45 = arith.constant 128 : i32
    %126 = arith.muli %c4_i32, %c128_i32_45 : i32
    %127 = tpu.assume_multiple %126, 128 : i32
    %c0_46 = arith.constant 0 : index
    %128 = arith.index_cast %127 : i32 to index
    %129 = vector.load %arg7[%c0_46, %128] : memref<16x1024xf32, #tpu.memory_space<vmem>>, vector<8x128xf32>
    %130 = math.tanh %129 : vector<8x128xf32>
    %c8_47 = arith.constant 8 : index
    %131 = arith.index_cast %127 : i32 to index
    %132 = vector.load %arg7[%c8_47, %131] : memref<16x1024xf32, #tpu.memory_space<vmem>>, vector<8x128xf32>
    %cst_48 = arith.constant 0xFF800000 : f32
    %133 = vector.shape_cast %9 : vector<1x128xi1> to vector<1x128xi1>
    %134 = vector.broadcast %133 : vector<1x128xi1> to vector<8x128xi1>
    %135 = vector.broadcast %cst_48 : f32 to vector<8x128xf32>
    %136 = arith.select %134, %130, %135 : vector<8x128xi1>, vector<8x128xf32>
    %cst_49 = arith.constant dense<0xFF800000> : vector<8xf32>
    %137 = vector.multi_reduction <maximumf>, %136, %cst_49 [1] : vector<8x128xf32> to vector<8xf32>
    %138 = vector.shape_cast %137 : vector<8xf32> to vector<8x1xf32>
    %139 = vector.broadcast %138 : vector<8x1xf32> to vector<8x128xf32>
    %140 = arith.subf %136, %139 : vector<8x128xf32>
    %141 = math.exp %140 : vector<8x128xf32>
    %cst_50 = arith.constant dense<0.000000e+00> : vector<8xf32>
    %142 = vector.multi_reduction <add>, %141, %cst_50 [1] : vector<8x128xf32> to vector<8xf32>
    %143 = vector.shape_cast %142 : vector<8xf32> to vector<8x1xf32>
    %144 = tpu.reciprocal %143 {approx = true} : vector<8x1xf32> -> vector<8x1xf32>
    %145 = vector.broadcast %144 : vector<8x1xf32> to vector<8x128xf32>
    %146 = arith.mulf %141, %145 : vector<8x128xf32>
    %147 = arith.index_cast %c4_i32 : i32 to index
    %c0_51 = arith.constant 0 : index
    %c0_52 = arith.constant 0 : index
    %148 = vector.load %arg5[%147, %c0_51, %c0_52] : memref<8x8x128xf32, #tpu.memory_space<vmem>>, vector<1x8x128xf32>
    %149 = vector.shape_cast %148 : vector<1x8x128xf32> to vector<8x128xf32>
    %150 = vector.shape_cast %146 : vector<8x128xf32> to vector<1x8x128xf32>
    tpu.vector_store %arg5[%147, %c0_51, %c0_52], %150 {strides = array<i32>} : memref<8x8x128xf32, #tpu.memory_space<vmem>>, vector<1x8x128xf32>,
    %151 = arith.index_cast %c4_i32 : i32 to index
    %c0_53 = arith.constant 0 : index
    %c0_54 = arith.constant 0 : index
    %152 = vector.load %arg6[%151, %c0_53, %c0_54] : memref<8x8x128xf32, #tpu.memory_space<vmem>>, vector<1x8x128xf32>
    %153 = vector.shape_cast %152 : vector<1x8x128xf32> to vector<8x128xf32>
    %154 = vector.shape_cast %132 : vector<8x128xf32> to vector<1x8x128xf32>
    tpu.vector_store %arg6[%151, %c0_53, %c0_54], %154 {strides = array<i32>} : memref<8x8x128xf32, #tpu.memory_space<vmem>>, vector<1x8x128xf32>,
    %c5_i32 = arith.constant 5 : i32
    %c128_i32_55 = arith.constant 128 : i32
    %155 = arith.muli %c5_i32, %c128_i32_55 : i32
    %156 = tpu.assume_multiple %155, 128 : i32
    %c0_56 = arith.constant 0 : index
    %157 = arith.index_cast %156 : i32 to index
    %158 = vector.load %arg7[%c0_56, %157] : memref<16x1024xf32, #tpu.memory_space<vmem>>, vector<8x128xf32>
    %159 = math.tanh %158 : vector<8x128xf32>
    %c8_57 = arith.constant 8 : index
    %160 = arith.index_cast %156 : i32 to index
    %161 = vector.load %arg7[%c8_57, %160] : memref<16x1024xf32, #tpu.memory_space<vmem>>, vector<8x128xf32>
    %cst_58 = arith.constant 0xFF800000 : f32
    %162 = vector.shape_cast %9 : vector<1x128xi1> to vector<1x128xi1>
    %163 = vector.broadcast %162 : vector<1x128xi1> to vector<8x128xi1>
    %164 = vector.broadcast %cst_58 : f32 to vector<8x128xf32>
    %165 = arith.select %163, %159, %164 : vector<8x128xi1>, vector<8x128xf32>
    %cst_59 = arith.constant dense<0xFF800000> : vector<8xf32>
    %166 = vector.multi_reduction <maximumf>, %165, %cst_59 [1] : vector<8x128xf32> to vector<8xf32>
    %167 = vector.shape_cast %166 : vector<8xf32> to vector<8x1xf32>
    %168 = vector.broadcast %167 : vector<8x1xf32> to vector<8x128xf32>
    %169 = arith.subf %165, %168 : vector<8x128xf32>
    %170 = math.exp %169 : vector<8x128xf32>
    %cst_60 = arith.constant dense<0.000000e+00> : vector<8xf32>
    %171 = vector.multi_reduction <add>, %170, %cst_60 [1] : vector<8x128xf32> to vector<8xf32>
    %172 = vector.shape_cast %171 : vector<8xf32> to vector<8x1xf32>
    %173 = tpu.reciprocal %172 {approx = true} : vector<8x1xf32> -> vector<8x1xf32>
    %174 = vector.broadcast %173 : vector<8x1xf32> to vector<8x128xf32>
    %175 = arith.mulf %170, %174 : vector<8x128xf32>
    %176 = arith.index_cast %c5_i32 : i32 to index
    %c0_61 = arith.constant 0 : index
    %c0_62 = arith.constant 0 : index
    %177 = vector.load %arg5[%176, %c0_61, %c0_62] : memref<8x8x128xf32, #tpu.memory_space<vmem>>, vector<1x8x128xf32>
    %178 = vector.shape_cast %177 : vector<1x8x128xf32> to vector<8x128xf32>
    %179 = vector.shape_cast %175 : vector<8x128xf32> to vector<1x8x128xf32>
    tpu.vector_store %arg5[%176, %c0_61, %c0_62], %179 {strides = array<i32>} : memref<8x8x128xf32, #tpu.memory_space<vmem>>, vector<1x8x128xf32>,
    %180 = arith.index_cast %c5_i32 : i32 to index
    %c0_63 = arith.constant 0 : index
    %c0_64 = arith.constant 0 : index
    %181 = vector.load %arg6[%180, %c0_63, %c0_64] : memref<8x8x128xf32, #tpu.memory_space<vmem>>, vector<1x8x128xf32>
    %182 = vector.shape_cast %181 : vector<1x8x128xf32> to vector<8x128xf32>
    %183 = vector.shape_cast %161 : vector<8x128xf32> to vector<1x8x128xf32>
    tpu.vector_store %arg6[%180, %c0_63, %c0_64], %183 {strides = array<i32>} : memref<8x8x128xf32, #tpu.memory_space<vmem>>, vector<1x8x128xf32>,
    %c6_i32 = arith.constant 6 : i32
    %c128_i32_65 = arith.constant 128 : i32
    %184 = arith.muli %c6_i32, %c128_i32_65 : i32
    %185 = tpu.assume_multiple %184, 128 : i32
    %c0_66 = arith.constant 0 : index
    %186 = arith.index_cast %185 : i32 to index
    %187 = vector.load %arg7[%c0_66, %186] : memref<16x1024xf32, #tpu.memory_space<vmem>>, vector<8x128xf32>
    %188 = math.tanh %187 : vector<8x128xf32>
    %c8_67 = arith.constant 8 : index
    %189 = arith.index_cast %185 : i32 to index
    %190 = vector.load %arg7[%c8_67, %189] : memref<16x1024xf32, #tpu.memory_space<vmem>>, vector<8x128xf32>
    %cst_68 = arith.constant 0xFF800000 : f32
    %191 = vector.shape_cast %9 : vector<1x128xi1> to vector<1x128xi1>
    %192 = vector.broadcast %191 : vector<1x128xi1> to vector<8x128xi1>
    %193 = vector.broadcast %cst_68 : f32 to vector<8x128xf32>
    %194 = arith.select %192, %188, %193 : vector<8x128xi1>, vector<8x128xf32>
    %cst_69 = arith.constant dense<0xFF800000> : vector<8xf32>
    %195 = vector.multi_reduction <maximumf>, %194, %cst_69 [1] : vector<8x128xf32> to vector<8xf32>
    %196 = vector.shape_cast %195 : vector<8xf32> to vector<8x1xf32>
    %197 = vector.broadcast %196 : vector<8x1xf32> to vector<8x128xf32>
    %198 = arith.subf %194, %197 : vector<8x128xf32>
    %199 = math.exp %198 : vector<8x128xf32>
    %cst_70 = arith.constant dense<0.000000e+00> : vector<8xf32>
    %200 = vector.multi_reduction <add>, %199, %cst_70 [1] : vector<8x128xf32> to vector<8xf32>
    %201 = vector.shape_cast %200 : vector<8xf32> to vector<8x1xf32>
    %202 = tpu.reciprocal %201 {approx = true} : vector<8x1xf32> -> vector<8x1xf32>
    %203 = vector.broadcast %202 : vector<8x1xf32> to vector<8x128xf32>
    %204 = arith.mulf %199, %203 : vector<8x128xf32>
    %205 = arith.index_cast %c6_i32 : i32 to index
    %c0_71 = arith.constant 0 : index
    %c0_72 = arith.constant 0 : index
    %206 = vector.load %arg5[%205, %c0_71, %c0_72] : memref<8x8x128xf32, #tpu.memory_space<vmem>>, vector<1x8x128xf32>
    %207 = vector.shape_cast %206 : vector<1x8x128xf32> to vector<8x128xf32>
    %208 = vector.shape_cast %204 : vector<8x128xf32> to vector<1x8x128xf32>
    tpu.vector_store %arg5[%205, %c0_71, %c0_72], %208 {strides = array<i32>} : memref<8x8x128xf32, #tpu.memory_space<vmem>>, vector<1x8x128xf32>,
    %209 = arith.index_cast %c6_i32 : i32 to index
    %c0_73 = arith.constant 0 : index
    %c0_74 = arith.constant 0 : index
    %210 = vector.load %arg6[%209, %c0_73, %c0_74] : memref<8x8x128xf32, #tpu.memory_space<vmem>>, vector<1x8x128xf32>
    %211 = vector.shape_cast %210 : vector<1x8x128xf32> to vector<8x128xf32>
    %212 = vector.shape_cast %190 : vector<8x128xf32> to vector<1x8x128xf32>
    tpu.vector_store %arg6[%209, %c0_73, %c0_74], %212 {strides = array<i32>} : memref<8x8x128xf32, #tpu.memory_space<vmem>>, vector<1x8x128xf32>,
    %c7_i32 = arith.constant 7 : i32
    %c128_i32_75 = arith.constant 128 : i32
    %213 = arith.muli %c7_i32, %c128_i32_75 : i32
    %214 = tpu.assume_multiple %213, 128 : i32
    %c0_76 = arith.constant 0 : index
    %215 = arith.index_cast %214 : i32 to index
    %216 = vector.load %arg7[%c0_76, %215] : memref<16x1024xf32, #tpu.memory_space<vmem>>, vector<8x128xf32>
    %217 = math.tanh %216 : vector<8x128xf32>
    %c8_77 = arith.constant 8 : index
    %218 = arith.index_cast %214 : i32 to index
    %219 = vector.load %arg7[%c8_77, %218] : memref<16x1024xf32, #tpu.memory_space<vmem>>, vector<8x128xf32>
    %cst_78 = arith.constant 0xFF800000 : f32
    %220 = vector.shape_cast %9 : vector<1x128xi1> to vector<1x128xi1>
    %221 = vector.broadcast %220 : vector<1x128xi1> to vector<8x128xi1>
    %222 = vector.broadcast %cst_78 : f32 to vector<8x128xf32>
    %223 = arith.select %221, %217, %222 : vector<8x128xi1>, vector<8x128xf32>
    %cst_79 = arith.constant dense<0xFF800000> : vector<8xf32>
    %224 = vector.multi_reduction <maximumf>, %223, %cst_79 [1] : vector<8x128xf32> to vector<8xf32>
    %225 = vector.shape_cast %224 : vector<8xf32> to vector<8x1xf32>
    %226 = vector.broadcast %225 : vector<8x1xf32> to vector<8x128xf32>
    %227 = arith.subf %223, %226 : vector<8x128xf32>
    %228 = math.exp %227 : vector<8x128xf32>
    %cst_80 = arith.constant dense<0.000000e+00> : vector<8xf32>
    %229 = vector.multi_reduction <add>, %228, %cst_80 [1] : vector<8x128xf32> to vector<8xf32>
    %230 = vector.shape_cast %229 : vector<8xf32> to vector<8x1xf32>
    %231 = tpu.reciprocal %230 {approx = true} : vector<8x1xf32> -> vector<8x1xf32>
    %232 = vector.broadcast %231 : vector<8x1xf32> to vector<8x128xf32>
    %233 = arith.mulf %228, %232 : vector<8x128xf32>
    %234 = arith.index_cast %c7_i32 : i32 to index
    %c0_81 = arith.constant 0 : index
    %c0_82 = arith.constant 0 : index
    %235 = vector.load %arg5[%234, %c0_81, %c0_82] : memref<8x8x128xf32, #tpu.memory_space<vmem>>, vector<1x8x128xf32>
    %236 = vector.shape_cast %235 : vector<1x8x128xf32> to vector<8x128xf32>
    %237 = vector.shape_cast %233 : vector<8x128xf32> to vector<1x8x128xf32>
    tpu.vector_store %arg5[%234, %c0_81, %c0_82], %237 {strides = array<i32>} : memref<8x8x128xf32, #tpu.memory_space<vmem>>, vector<1x8x128xf32>,
    %238 = arith.index_cast %c7_i32 : i32 to index
    %c0_83 = arith.constant 0 : index
    %c0_84 = arith.constant 0 : index
    %239 = vector.load %arg6[%238, %c0_83, %c0_84] : memref<8x8x128xf32, #tpu.memory_space<vmem>>, vector<1x8x128xf32>
    %240 = vector.shape_cast %239 : vector<1x8x128xf32> to vector<8x128xf32>
    %241 = vector.shape_cast %219 : vector<8x128xf32> to vector<1x8x128xf32>
    tpu.vector_store %arg6[%238, %c0_83, %c0_84], %241 {strides = array<i32>} : memref<8x8x128xf32, #tpu.memory_space<vmem>>, vector<1x8x128xf32>,
    %c8_i32 = arith.constant 8 : i32
    %c0_85 = arith.constant 0 : index
    %c0_86 = arith.constant 0 : index
    %c0_87 = arith.constant 0 : index
    %242 = vector.load %arg5[%c0_85, %c0_86, %c0_87] : memref<8x8x128xf32, #tpu.memory_space<vmem>>, vector<8x8x128xf32>
    %c0_88 = arith.constant 0 : index
    %c0_89 = arith.constant 0 : index
    %c0_90 = arith.constant 0 : index
    %243 = vector.load %arg6[%c0_88, %c0_89, %c0_90] : memref<8x8x128xf32, #tpu.memory_space<vmem>>, vector<8x8x128xf32>
    %244 = arith.mulf %242, %243 : vector<8x8x128xf32>
    %cst_91 = arith.constant dense<0.000000e+00> : vector<8x8xf32>
    %245 = vector.multi_reduction <add>, %244, %cst_91 [2] : vector<8x8x128xf32> to vector<8x8xf32>
    %c0_92 = arith.constant 0 : index
    %c0_93 = arith.constant 0 : index
    %246 = vector.load %arg4[%c0_92, %c0_93] : memref<8x8xf32, #tpu.memory_space<vmem>>, vector<8x8xf32>
    tpu.vector_store %arg4[%c0_92, %c0_93], %245 {strides = array<i32>} : memref<8x8xf32, #tpu.memory_space<vmem>>, vector<8x8xf32>,
    return
  }
  func.func @transform_0(%arg0: i32) -> (i32, i32) {
    %c0_i32 = arith.constant 0 : i32
    %c0_i32_0 = arith.constant 0 : i32
    return %c0_i32, %arg0 : i32, i32
  }
  func.func @transform_1(%arg0: i32) -> (i32, i32) {
    %c0_i32 = arith.constant 0 : i32
    %c0_i32_0 = arith.constant 0 : i32
    %c0_i32_1 = arith.constant 0 : i32
    return %c0_i32, %c0_i32_0 : i32, i32
  }
  func.func @transform_2(%arg0: i32) -> (i32, i32) {
    %c0_i32 = arith.constant 0 : i32
    %c0_i32_0 = arith.constant 0 : i32
    %c0_i32_1 = arith.constant 0 : i32
    return %c0_i32, %c0_i32_0 : i32, i32
  }
  func.func @transform_3(%arg0: i32) -> (i32, i32) {
    %c0_i32 = arith.constant 0 : i32
    %c0_i32_0 = arith.constant 0 : i32
    return %arg0, %c0_i32 : i32, i32
  }
  func.func @transform_4(%arg0: i32) -> (i32, i32, i32) {
    %c0_i32 = arith.constant 0 : i32
    %c0_i32_0 = arith.constant 0 : i32
    %c0_i32_1 = arith.constant 0 : i32
    return %arg0, %c0_i32, %c0_i32_0 : i32, i32, i32
  }
  func.func @transform_5(%arg0: i32) -> (i32, i32, i32) {
    %c0_i32 = arith.constant 0 : i32
    %c0_i32_0 = arith.constant 0 : i32
    %c0_i32_1 = arith.constant 0 : i32
    return %arg0, %c0_i32, %c0_i32_0 : i32, i32, i32
  }
}

</mosaic_0001>

<llo_original>
// kernel: att_block_v2.1
$region0: #{att_block_v2.1}
  #allocation0 [shape = 'u32[]', space=smem, size = 0x4, offset = 0x4, fixed_abs, tag = 'smem constant byte address 0x4 - core index']
  #allocation1 [shape = 'u32[72,128]{1,0:T(1,128)}', space=vmem, size = 0x9000, scoped, tag = 'internal scratch']
  #allocation2 [shape = 'f32[16,1024]{1,0:T(8,128)}', space=vmem, size = 0x10000, scoped, tag = 'scratch operand']
  %s0 = inlined_call_operand.vmem [shape: bf16[32,2048], index: 0, kind: input, shape index: {}]
  %s1 = inlined_call_operand.vmem [shape: bf16[16,32], index: 1, kind: input, shape index: {}]
  %s2 = inlined_call_operand.vmem [shape: f32[16,1], index: 2, kind: input, shape index: {}]
  %s3 = inlined_call_operand.vmem [shape: f32[16,8], index: 3, kind: output, shape index: {0}]
  %s4 = inlined_call_operand.vmem [shape: f32[16,8,128], index: 4, kind: output, shape index: {1}]
  %s5 = inlined_call_operand.vmem [shape: f32[16,8,128], index: 5, kind: output, shape index: {2}]
  %6 = xla_tuple %s3, %s4, %s5
  %s7 = sld [smem:[#allocation0]]
  $region84: #{att_block_v2.1} parent=0
    _
  %s9 = ssub.s32 1, %s7
  %s10 = scalar_select 0, %s9, %s7
  $region1: #{att_block_v2.1} parent=0
    #allocation3 [shape = 'u8[131072]{0}', space=vmem, size = 0x20000, scoped, tag = 'input window, operand 0']
    loop: start=0, step=1, limit=4
    $region2: #{att_block_v2.1} parent=1 // loop_pre_header
      _
    $region3: #{att_block_v2.1} parent=1 // loop_header
      %s12 = sphi 0, %s16
      %p13 = scmp.ge.s32.totalorder %s12, 4
      %s22 = sphi 0, %s24
      %s25 = sphi 0, %s22
      %s26 = sphi 0, %s25
      %s42 = sphi 0, %s26
      %s46 = sphi 0, %s46
      %s48 = sphi 0, %s46
      %s49 = sphi 0, %s48
      %s63 = sphi 0, %s49
      %s67 = sphi 0, %s67
      %s69 = sphi 0, %s67
      %s70 = sphi 0, %s69
      %s84 = sphi 0, %s70
      %s90 = sphi 0, %s92
      %s93 = sphi 0, %s90
      %s94 = sphi 0, %s93
      %s110 = sphi 0, %s94
      %s116 = sphi 0, %s118
      %s119 = sphi 0, %s116
      %s120 = sphi 0, %s119
      %s136 = sphi 0, %s120
      %s142 = sphi 0, %s144
      %s145 = sphi 0, %s142
      %s146 = sphi 0, %s145
      %s162 = sphi 0, %s146
    $region4: #{att_block_v2.1} parent=1 // loop_header_branch
      %15 = sbr.rel (%p13) target = $region8
    $region5: #{att_block_v2.1} parent=1 // loop_body
      %s17 = ssub.s32 %s12, 1
      %s18 = ssub.s32 %s12, 2
      %s19 = sadd.s32 %s12, 1
      %s20 = ssub.s32 %s12, %s19
      %p21 = scmp.eq.s32.totalorder %s20, 0
      %s23 = sadd.s32 %s22, 1
      %s24 = scalar_select %p21, %s22, %s23
      %p27 = pneg %p21
      %p28 = scmp.eq.s32.totalorder %s12, 1
      %p29 = por %p27, %p28
      %p30 = scmp.ne.s32.totalorder %s22, %s25
      %p31 = scmp.eq.s32.totalorder %s12, 0
      %p32 = por %p30, %p31
      %p33 = scmp.ne.s32.totalorder %s22, %s25
      %p34 = scmp.eq.s32.totalorder %s17, 1
      %p35 = por %p33, %p34
      %p36 = scmp.ne.s32.totalorder %s25, %s26
      %p37 = scmp.eq.s32.totalorder %s17, 0
      %p38 = por %p36, %p37
      %p39 = scmp.ne.s32.totalorder %s25, %s26
      %p40 = scmp.eq.s32.totalorder %s18, 1
      %p41 = por %p39, %p40
      %p43 = scmp.ne.s32.totalorder %s26, %s42
      %p44 = scmp.eq.s32.totalorder %s18, 0
      %p45 = por %p43, %p44
      %s47 = sadd.s32 %s46, 1
      %p50 = scmp.eq.s32.totalorder %s12, 1
      %p51 = scmp.ne.s32.totalorder %s46, %s48
      %p52 = scmp.eq.s32.totalorder %s12, 0
      %p53 = por %p51, %p52
      %p54 = scmp.ne.s32.totalorder %s46, %s48
      %p55 = scmp.eq.s32.totalorder %s17, 1
      %p56 = por %p54, %p55
      %p57 = scmp.ne.s32.totalorder %s48, %s49
      %p58 = scmp.eq.s32.totalorder %s17, 0
      %p59 = por %p57, %p58
      %p60 = scmp.ne.s32.totalorder %s48, %s49
      %p61 = scmp.eq.s32.totalorder %s18, 1
      %p62 = por %p60, %p61
      %p64 = scmp.ne.s32.totalorder %s49, %s63
      %p65 = scmp.eq.s32.totalorder %s18, 0
      %p66 = por %p64, %p65
      %s68 = sadd.s32 %s67, 1
      %p71 = scmp.eq.s32.totalorder %s12, 1
      %p72 = scmp.ne.s32.totalorder %s67, %s69
      %p73 = scmp.eq.s32.totalorder %s12, 0
      %p74 = por %p72, %p73
      %p75 = scmp.ne.s32.totalorder %s67, %s69
      %p76 = scmp.eq.s32.totalorder %s17, 1
      %p77 = por %p75, %p76
      %p78 = scmp.ne.s32.totalorder %s69, %s70
      %p79 = scmp.eq.s32.totalorder %s17, 0
      %p80 = por %p78, %p79
      %p81 = scmp.ne.s32.totalorder %s69, %s70
      %p82 = scmp.eq.s32.totalorder %s18, 1
      %p83 = por %p81, %p82
      %p85 = scmp.ne.s32.totalorder %s70, %s84
      %p86 = scmp.eq.s32.totalorder %s18, 0
      %p87 = por %p85, %p86
      %s88 = ssub.s32 %s12, %s19
      %p89 = scmp.eq.s32.totalorder %s88, 0
      %s91 = sadd.s32 %s90, 1
      %s92 = scalar_select %p89, %s90, %s91
      %p95 = pneg %p89
      %p96 = scmp.eq.s32.totalorder %s12, 1
      %p97 = por %p95, %p96
      %p98 = scmp.ne.s32.totalorder %s90, %s93
      %p99 = scmp.eq.s32.totalorder %s12, 0
      %p100 = por %p98, %p99
      %p101 = scmp.ne.s32.totalorder %s90, %s93
      %p102 = scmp.eq.s32.totalorder %s17, 1
      %p103 = por %p101, %p102
      %p104 = scmp.ne.s32.totalorder %s93, %s94
      %p105 = scmp.eq.s32.totalorder %s17, 0
      %p106 = por %p104, %p105
      %p107 = scmp.ne.s32.totalorder %s93, %s94
      %p108 = scmp.eq.s32.totalorder %s18, 1
      %p109 = por %p107, %p108
      %p111 = scmp.ne.s32.totalorder %s94, %s110
      %p112 = scmp.eq.s32.totalorder %s18, 0
      %p113 = por %p111, %p112
      %s114 = ssub.s32 %s12, %s19
      %p115 = scmp.eq.s32.totalorder %s114, 0
      %s117 = sadd.s32 %s116, 1
      %s118 = scalar_select %p115, %s116, %s117
      %p121 = pneg %p115
      %p122 = scmp.eq.s32.totalorder %s12, 1
      %p123 = por %p121, %p122
      %p124 = scmp.ne.s32.totalorder %s116, %s119
      %p125 = scmp.eq.s32.totalorder %s12, 0
      %p126 = por %p124, %p125
      %p127 = scmp.ne.s32.totalorder %s116, %s119
      %p128 = scmp.eq.s32.totalorder %s17, 1
      %p129 = por %p127, %p128
      %p130 = scmp.ne.s32.totalorder %s119, %s120
      %p131 = scmp.eq.s32.totalorder %s17, 0
      %p132 = por %p130, %p131
      %p133 = scmp.ne.s32.totalorder %s119, %s120
      %p134 = scmp.eq.s32.totalorder %s18, 1
      %p135 = por %p133, %p134
      %p137 = scmp.ne.s32.totalorder %s120, %s136
      %p138 = scmp.eq.s32.totalorder %s18, 0
      %p139 = por %p137, %p138
      %s140 = ssub.s32 %s12, %s19
      %p141 = scmp.eq.s32.totalorder %s140, 0
      %s143 = sadd.s32 %s142, 1
      %s144 = scalar_select %p141, %s142, %s143
      %p147 = pneg %p141
      %p148 = scmp.eq.s32.totalorder %s12, 1
      %p149 = por %p147, %p148
      %p150 = scmp.ne.s32.totalorder %s142, %s145
      %p151 = scmp.eq.s32.totalorder %s12, 0
      %p152 = por %p150, %p151
      %p153 = scmp.ne.s32.totalorder %s142, %s145
      %p154 = scmp.eq.s32.totalorder %s17, 1
      %p155 = por %p153, %p154
      %p156 = scmp.ne.s32.totalorder %s145, %s146
      %p157 = scmp.eq.s32.totalorder %s17, 0
      %p158 = por %p156, %p157
      %p159 = scmp.ne.s32.totalorder %s145, %s146
      %p160 = scmp.eq.s32.totalorder %s18, 1
      %p161 = por %p159, %p160
      %p163 = scmp.ne.s32.totalorder %s146, %s162
      %p164 = scmp.eq.s32.totalorder %s18, 0
      %p165 = por %p163, %p164
      %p166 = scmp.le.s32.totalorder 1, %s12
      %p167 = scmp.lt.s32.totalorder %s12, 3
      %p168 = pnand %p166, %p167
      %p169 = pneg %p168
      // Predicated region
      $region9: #{att_block_v2.1} parent=5 // pred_check
        _
      $region10: #{att_block_v2.1} parent=5 // pred_check_branch
        %171 = sbr.rel (%p168) target = $region12
      $region11: #{att_block_v2.1} parent=5 // pred_region
        %s172 = ssub.s32 %s12, 1
        // Predicated region
        $region13: #{att_block_v2.1} parent=11 // pred_check
          %p173 = pneg %p59
        $region14: #{att_block_v2.1} parent=11 // pred_check_branch
          %175 = sbr.rel (%p173) target = $region16
        $region15: #{att_block_v2.1} parent=11 // pred_region
          _
        $region16: #{att_block_v2.1} parent=11 // pred_fallthru
          _
        // Predicated region
        $region17: #{att_block_v2.1} parent=11 // pred_check
          %p176 = pneg %p80
        $region18: #{att_block_v2.1} parent=11 // pred_check_branch
          %178 = sbr.rel (%p176) target = $region20
        $region19: #{att_block_v2.1} parent=11 // pred_region
          _
        $region20: #{att_block_v2.1} parent=11 // pred_fallthru
          _
      $region12: #{att_block_v2.1} parent=5 // pred_fallthru
        _
      %p179 = scmp.lt.s32.totalorder %s12, 2
      // Predicated region
      $region21: #{att_block_v2.1} parent=5 // pred_check
        %p180 = pneg %p179
      $region22: #{att_block_v2.1} parent=5 // pred_check_branch
        %182 = sbr.rel (%p180) target = $region24
      $region23: #{att_block_v2.1} parent=5 // pred_region
        // Predicated region
        $region25: #{att_block_v2.1} parent=23 // pred_check
          %p183 = pneg %p32
        $region26: #{att_block_v2.1} parent=23 // pred_check_branch
          %185 = sbr.rel (%p183) target = $region28
        $region27: #{att_block_v2.1} parent=23 // pred_region
          %s186 = sand.u32 %s22, 1
          %s187 = sand.u32 %s22, 1
          %s188 = smul.addr %s187, 128
          %s189 = scalar_lea.vmem [#allocation3], %s188
          %s190 = smul.u32 8, %s12
          %s191 = smul.addr %s190, 4
          %s192 = scalar_lea.vmem %s0, %s191
          // Predicated region
          $region29: #{att_block_v2.1} parent=27 // pred_check
            _
          $region30: #{att_block_v2.1} parent=27 // pred_check_branch
            %194 = sbr.rel (0) target = $region32
          $region31: #{att_block_v2.1} parent=27 // pred_region
            // Predicated region
            $region33: #{att_block_v2.1} parent=31 // pred_check
              _
            $region34: #{att_block_v2.1} parent=31 // pred_check_branch
              %196 = sbr.rel (0) target = $region36
            $region35: #{att_block_v2.1} parent=31 // pred_region
              loop: start=0, step=1, limit=1
              $region37: #{att_block_v2.1} parent=35 // loop_pre_header
                _
              $region38: #{att_block_v2.1} parent=35 // loop_header
                %s198 = sphi 0, %s202
                %p199 = scmp.ge.s32.totalorder %s198, 1
                %s203 = sphi %s192, %s192
                %s204 = sphi %s189, %s189
              $region39: #{att_block_v2.1} parent=35 // loop_header_branch
                %201 = sbr.rel (%p199) target = $region43
              $region40: #{att_block_v2.1} parent=35 // loop_body
                %v205 = vld [vmem:[%s203] sm:$0xff]
                %206 = vst [vmem:[%s204] sm:$0xff] %v205
                %v207 = vld [vmem:[%s203 + $0x8] sm:$0xff]
                %208 = vst [vmem:[%s204 + $0x8] sm:$0xff] %v207
                %v209 = vld [vmem:[%s203 + $0x10] sm:$0xff]
                %210 = vst [vmem:[%s204 + $0x10] sm:$0xff] %v209
                %v211 = vld [vmem:[%s203 + $0x18] sm:$0xff]
                %212 = vst [vmem:[%s204 + $0x18] sm:$0xff] %v211
                %v213 = vld [vmem:[%s203 + $0x40] sm:$0xff]
                %214 = vst [vmem:[%s204 + $0x20] sm:$0xff] %v213
                %v215 = vld [vmem:[%s203 + $0x48] sm:$0xff]
                %216 = vst [vmem:[%s204 + $0x28] sm:$0xff] %v215
                %v217 = vld [vmem:[%s203 + $0x50] sm:$0xff]
                %218 = vst [vmem:[%s204 + $0x30] sm:$0xff] %v217
                %v219 = vld [vmem:[%s203 + $0x58] sm:$0xff]
                %220 = vst [vmem:[%s204 + $0x38] sm:$0xff] %v219
                %v221 = vld [vmem:[%s203 + $0x80] sm:$0xff]
                %222 = vst [vmem:[%s204 + $0x40] sm:$0xff] %v221
                %v223 = vld [vmem:[%s203 + $0x88] sm:$0xff]
                %224 = vst [vmem:[%s204 + $0x48] sm:$0xff] %v223
                %v225 = vld [vmem:[%s203 + $0x90] sm:$0xff]
                %226 = vst [vmem:[%s204 + $0x50] sm:$0xff] %v225
                %v227 = vld [vmem:[%s203 + $0x98] sm:$0xff]
                %228 = vst [vmem:[%s204 + $0x58] sm:$0xff] %v227
                %v229 = vld [vmem:[%s203 + $0xc0] sm:$0xff]
                %230 = vst [vmem:[%s204 + $0x60] sm:$0xff] %v229
                %v231 = vld [vmem:[%s203 + $0xc8] sm:$0xff]
                %232 = vst [vmem:[%s204 + $0x68] sm:$0xff] %v231
                %v233 = vld [vmem:[%s203 + $0xd0] sm:$0xff]
                %234 = vst [vmem:[%s204 + $0x70] sm:$0xff] %v233
                %v235 = vld [vmem:[%s203 + $0xd8] sm:$0xff]
                %236 = vst [vmem:[%s204 + $0x78] sm:$0xff] %v235
              $region41: #{att_block_v2.1} parent=35 // loop_footer
                %s202 = sadd.s32 1, %s198
              $region42: #{att_block_v2.1} parent=35 // loop_footer_branch
                %197 = sbr.rel target = $region38
              $region43: #{att_block_v2.1} parent=35 // loop_exit
                _
            $region36: #{att_block_v2.1} parent=31 // pred_fallthru
              _
            // Predicated region
            $region44: #{att_block_v2.1} parent=31 // pred_check
              _
            $region45: #{att_block_v2.1} parent=31 // pred_check_branch
              %238 = sbr.rel target = $region47
            $region46: #{att_block_v2.1} parent=31 // pred_region
              _
            $region47: #{att_block_v2.1} parent=31 // pred_fallthru
              _
          $region32: #{att_block_v2.1} parent=27 // pred_fallthru
            _
          %239 = vnop
        $region28: #{att_block_v2.1} parent=23 // pred_fallthru
          _
      $region24: #{att_block_v2.1} parent=5 // pred_fallthru
        _
      %p240 = scmp.le.s32.totalorder 1, %s12
      %p241 = scmp.lt.s32.totalorder %s12, 3
      %p242 = pnand %p240, %p241
      %p243 = pneg %p242
      // Predicated region
      $region48: #{att_block_v2.1} parent=5 // pred_check
        _
      $region49: #{att_block_v2.1} parent=5 // pred_check_branch
        %245 = sbr.rel (%p242) target = $region51
      $region50: #{att_block_v2.1} parent=5 // pred_region
        %s246 = ssub.s32 %s12, 1
        %s247 = sand.u32 %s25, 1
        %s248 = sand.u32 %s25, 1
        %s249 = smul.addr %s248, 128
        %s250 = scalar_lea.vmem [#allocation3], %s249
        // Predicated region
        $region52: #{att_block_v2.1} parent=50 // pred_check
          %p251 = pneg %p38
        $region53: #{att_block_v2.1} parent=50 // pred_check_branch
          %253 = sbr.rel (%p251) target = $region55
        $region54: #{att_block_v2.1} parent=50 // pred_region
          _
        $region55: #{att_block_v2.1} parent=50 // pred_fallthru
          _
        %s254 = sand.u32 %s25, 1
        %s255 = sand.u32 %s25, 1
        %s256 = smul.addr %s255, 128
        %s257 = scalar_lea.vmem [#allocation3], %s256
        %p258 = pneg %p38
        %p259 = pneg %p35
        %p260 = pneg %p59
        %p261 = pneg %p56
        %p262 = pneg %p80
        %p263 = pneg %p77
        %p264 = pneg %p106
        %p265 = pneg %p103
        %p266 = scmp.lt.s32.totalorder %s17, 1
        %s267 = scalar_select %p266, %s17, 1
        %s268 = smul.addr %s267, 8
        %s269 = scalar_lea.vmem %s3, %s268
        %p270 = pneg %p132
        %p271 = pneg %p129
        %s272 = smul.u32 8, %s17
        %p273 = scmp.lt.s32.totalorder %s272, 15
        %s274 = scalar_select %p273, %s272, 15
        %s275 = smul.addr %s274, 8
        %s276 = scalar_lea.vmem %s4, %s275
        %p277 = pneg %p158
        %p278 = pneg %p155
        %s279 = smul.u32 8, %s17
        %p280 = scmp.lt.s32.totalorder %s279, 15
        %s281 = scalar_select %p280, %s279, 15
        %s282 = smul.addr %s281, 8
        %s283 = scalar_lea.vmem %s5, %s282
        %s284 = smul.u32 8, %s17
        %p285 = scmp.lt.s32.totalorder %s17, 1
        %s286 = scalar_select %p285, %s17, 1
        %s287 = smul.addr %s286, 8
        %s288 = scalar_lea.vmem %s3, %s287
        %s289 = smul.u32 8, %s17
        %p290 = scmp.lt.s32.totalorder %s289, 15
        %s291 = scalar_select %p290, %s289, 15
        %s292 = smul.addr %s291, 8
        %s293 = scalar_lea.vmem %s4, %s292
        %s294 = smul.u32 8, %s17
        %s295 = smul.u32 8, %s17
        %p296 = scmp.lt.s32.totalorder %s295, 15
        %s297 = scalar_select %p296, %s295, 15
        %s298 = smul.addr %s297, 8
        %s299 = scalar_lea.vmem %s5, %s298
        %s300 = smul.u32 8, %s17
        %v302 = vld [vmem:[%s1] sm:$0xf]
        %v303 = vld [vmem:[%s1 + $0x4] sm:$0xf]
        %v304 = vld [vmem:[%s250] sm:$0xff]
        %v305 = vld [vmem:[%s250 + $0x8] sm:$0xff]
        %v306 = vld [vmem:[%s250 + $0x10] sm:$0xff]
        %v307 = vld [vmem:[%s250 + $0x18] sm:$0xff]
        %v308 = vld [vmem:[%s250 + $0x20] sm:$0xff]
        %v309 = vld [vmem:[%s250 + $0x28] sm:$0xff]
        %v310 = vld [vmem:[%s250 + $0x30] sm:$0xff]
        %v311 = vld [vmem:[%s250 + $0x38] sm:$0xff]
        %v312 = vld [vmem:[%s250 + $0x40] sm:$0xff]
        %v313 = vld [vmem:[%s250 + $0x48] sm:$0xff]
        %v314 = vld [vmem:[%s250 + $0x50] sm:$0xff]
        %v315 = vld [vmem:[%s250 + $0x58] sm:$0xff]
        %v316 = vld [vmem:[%s250 + $0x60] sm:$0xff]
        %v317 = vld [vmem:[%s250 + $0x68] sm:$0xff]
        %v318 = vld [vmem:[%s250 + $0x70] sm:$0xff]
        %v319 = vld [vmem:[%s250 + $0x78] sm:$0xff]
        %v320 = vld [vmem:[%s2] sm:$0xff]
        %v321 = vld [vmem:[%s2 + $0x8] sm:$0xff]
        %323 = vset.pattern.permute.xlu0 0
        %324 = vperm.xlu0 %323, %v320
        %v325 = vpop.permute.xlu0 %324
        %328 = vset.pattern.permute.xlu0 0
        %329 = vperm.xlu0 %328, %v321
        %v330 = vpop.permute.xlu0 %329
        %v334 = vunpack.c.l.b16 %v302
        %v335 = vunpack.c.l.b16 %v303
        %v336 = vpack.c.b16 %v335, %v334
        %v353 = vunpack.c.l.b16 %v304
        %v354 = vunpack.c.h.b16 %v304
        %v355 = vunpack.c.l.b16 %v305
        %v356 = vunpack.c.h.b16 %v305
        %v357 = vunpack.c.l.b16 %v306
        %v358 = vunpack.c.h.b16 %v306
        %v359 = vunpack.c.l.b16 %v307
        %v360 = vunpack.c.h.b16 %v307
        %v361 = vunpack.c.l.b16 %v308
        %v362 = vunpack.c.h.b16 %v308
        %v363 = vunpack.c.l.b16 %v309
        %v364 = vunpack.c.h.b16 %v309
        %v365 = vunpack.c.l.b16 %v310
        %v366 = vunpack.c.h.b16 %v310
        %v367 = vunpack.c.l.b16 %v311
        %v368 = vunpack.c.h.b16 %v311
        %v369 = vunpack.c.l.b16 %v312
        %v370 = vunpack.c.h.b16 %v312
        %v371 = vunpack.c.l.b16 %v313
        %v372 = vunpack.c.h.b16 %v313
        %v373 = vunpack.c.l.b16 %v314
        %v374 = vunpack.c.h.b16 %v314
        %v375 = vunpack.c.l.b16 %v315
        %v376 = vunpack.c.h.b16 %v315
        %v377 = vunpack.c.l.b16 %v316
        %v378 = vunpack.c.h.b16 %v316
        %v379 = vunpack.c.l.b16 %v317
        %v380 = vunpack.c.h.b16 %v317
        %v381 = vunpack.c.l.b16 %v318
        %v382 = vunpack.c.h.b16 %v318
        %v383 = vunpack.c.l.b16 %v319
        %v384 = vunpack.c.h.b16 %v319
        %v385 = vpack.c.b16 %v361, %v353
        %v386 = vpack.c.b16 %v362, %v354
        %v387 = vpack.c.b16 %v363, %v355
        %v388 = vpack.c.b16 %v364, %v356
        %v389 = vpack.c.b16 %v365, %v357
        %v390 = vpack.c.b16 %v366, %v358
        %v391 = vpack.c.b16 %v367, %v359
        %v392 = vpack.c.b16 %v368, %v360
        %v393 = vpack.c.b16 %v377, %v369
        %v394 = vpack.c.b16 %v378, %v370
        %v395 = vpack.c.b16 %v379, %v371
        %v396 = vpack.c.b16 %v380, %v372
        %v397 = vpack.c.b16 %v381, %v373
        %v398 = vpack.c.b16 %v382, %v374
        %v399 = vpack.c.b16 %v383, %v375
        %v400 = vpack.c.b16 %v384, %v376
        %vm417 = vcmask 261120
        %v419 = vsel %vm417, %v336, 0
        %421 = vmatpush.bf16.msra.mxu0 0
        %422 = vmatpush.bf16.msra.mxu0 0
        %423 = vmatpush.bf16.msra.mxu0 0
        %424 = vmatpush.bf16.msra.mxu0 0
        %425 = vmatpush.bf16.msra.mxu0 0
        %426 = vmatpush.bf16.msra.mxu0 0
        %427 = vmatpush.bf16.msra.mxu0 %v393
        %428 = vmatpush.bf16.msra.mxu0 %v385
        %429 = vmatmul.bf16.gmra.mxu0 %v419
        %v430 = vpop.f32.mrf.mxu0
        %v431 = vadd.f32 %v325, %v430
        %v432 = vpop.f32.mrf.mxu0
        %v433 = vadd.f32 %v330, %v432
        %434 = vdwg.mxu0
        %435 = vmatpush.bf16.msra.mxu0 0
        %436 = vmatpush.bf16.msra.mxu0 0
        %437 = vmatpush.bf16.msra.mxu0 0
        %438 = vmatpush.bf16.msra.mxu0 0
        %439 = vmatpush.bf16.msra.mxu0 0
        %440 = vmatpush.bf16.msra.mxu0 0
        %441 = vmatpush.bf16.msra.mxu0 %v394
        %442 = vmatpush.bf16.msra.mxu0 %v386
        %443 = vmatmul.bf16.gmra.mxu0 %v419
        %v444 = vpop.f32.mrf.mxu0
        %v445 = vadd.f32 %v325, %v444
        %v446 = vpop.f32.mrf.mxu0
        %v447 = vadd.f32 %v330, %v446
        %448 = vdwg.mxu0
        %449 = vmatpush.bf16.msra.mxu0 0
        %450 = vmatpush.bf16.msra.mxu0 0
        %451 = vmatpush.bf16.msra.mxu0 0
        %452 = vmatpush.bf16.msra.mxu0 0
        %453 = vmatpush.bf16.msra.mxu0 0
        %454 = vmatpush.bf16.msra.mxu0 0
        %455 = vmatpush.bf16.msra.mxu0 %v395
        %456 = vmatpush.bf16.msra.mxu0 %v387
        %457 = vmatmul.bf16.gmra.mxu0 %v419
        %v458 = vpop.f32.mrf.mxu0
        %v459 = vadd.f32 %v325, %v458
        %v460 = vpop.f32.mrf.mxu0
        %v461 = vadd.f32 %v330, %v460
        %462 = vdwg.mxu0
        %463 = vmatpush.bf16.msra.mxu0 0
        %464 = vmatpush.bf16.msra.mxu0 0
        %465 = vmatpush.bf16.msra.mxu0 0
        %466 = vmatpush.bf16.msra.mxu0 0
        %467 = vmatpush.bf16.msra.mxu0 0
        %468 = vmatpush.bf16.msra.mxu0 0
        %469 = vmatpush.bf16.msra.mxu0 %v396
        %470 = vmatpush.bf16.msra.mxu0 %v388
        %471 = vmatmul.bf16.gmra.mxu0 %v419
        %v472 = vpop.f32.mrf.mxu0
        %v473 = vadd.f32 %v325, %v472
        %v474 = vpop.f32.mrf.mxu0
        %v475 = vadd.f32 %v330, %v474
        %476 = vdwg.mxu0
        %477 = vmatpush.bf16.msra.mxu0 0
        %478 = vmatpush.bf16.msra.mxu0 0
        %479 = vmatpush.bf16.msra.mxu0 0
        %480 = vmatpush.bf16.msra.mxu0 0
        %481 = vmatpush.bf16.msra.mxu0 0
        %482 = vmatpush.bf16.msra.mxu0 0
        %483 = vmatpush.bf16.msra.mxu0 %v397
        %484 = vmatpush.bf16.msra.mxu0 %v389
        %485 = vmatmul.bf16.gmra.mxu0 %v419
        %v486 = vpop.f32.mrf.mxu0
        %v487 = vadd.f32 %v325, %v486
        %v488 = vpop.f32.mrf.mxu0
        %v489 = vadd.f32 %v330, %v488
        %490 = vdwg.mxu0
        %491 = vmatpush.bf16.msra.mxu0 0
        %492 = vmatpush.bf16.msra.mxu0 0
        %493 = vmatpush.bf16.msra.mxu0 0
        %494 = vmatpush.bf16.msra.mxu0 0
        %495 = vmatpush.bf16.msra.mxu0 0
        %496 = vmatpush.bf16.msra.mxu0 0
        %497 = vmatpush.bf16.msra.mxu0 %v398
        %498 = vmatpush.bf16.msra.mxu0 %v390
        %499 = vmatmul.bf16.gmra.mxu0 %v419
        %v500 = vpop.f32.mrf.mxu0
        %v501 = vadd.f32 %v325, %v500
        %v502 = vpop.f32.mrf.mxu0
        %v503 = vadd.f32 %v330, %v502
        %504 = vdwg.mxu0
        %505 = vmatpush.bf16.msra.mxu0 0
        %506 = vmatpush.bf16.msra.mxu0 0
        %507 = vmatpush.bf16.msra.mxu0 0
        %508 = vmatpush.bf16.msra.mxu0 0
        %509 = vmatpush.bf16.msra.mxu0 0
        %510 = vmatpush.bf16.msra.mxu0 0
        %511 = vmatpush.bf16.msra.mxu0 %v399
        %512 = vmatpush.bf16.msra.mxu0 %v391
        %513 = vmatmul.bf16.gmra.mxu0 %v419
        %v514 = vpop.f32.mrf.mxu0
        %v515 = vadd.f32 %v325, %v514
        %v516 = vpop.f32.mrf.mxu0
        %v517 = vadd.f32 %v330, %v516
        %518 = vdwg.mxu0
        %519 = vmatpush.bf16.msra.mxu0 0
        %520 = vmatpush.bf16.msra.mxu0 0
        %521 = vmatpush.bf16.msra.mxu0 0
        %522 = vmatpush.bf16.msra.mxu0 0
        %523 = vmatpush.bf16.msra.mxu0 0
        %524 = vmatpush.bf16.msra.mxu0 0
        %525 = vmatpush.bf16.msra.mxu0 %v400
        %526 = vmatpush.bf16.msra.mxu0 %v392
        %527 = vmatmul.bf16.gmra.mxu0 %v419
        %v528 = vpop.f32.mrf.mxu0
        %v529 = vadd.f32 %v325, %v528
        %v530 = vpop.f32.mrf.mxu0
        %v531 = vadd.f32 %v330, %v530
        %532 = vdwg.mxu0
        %533 = vst [vmem:[#allocation2] sm:$0xff] %v431
        %534 = vst [vmem:[#allocation2 + $0x8] sm:$0xff] %v445
        %535 = vst [vmem:[#allocation2 + $0x10] sm:$0xff] %v459
        %536 = vst [vmem:[#allocation2 + $0x18] sm:$0xff] %v473
        %537 = vst [vmem:[#allocation2 + $0x20] sm:$0xff] %v487
        %538 = vst [vmem:[#allocation2 + $0x28] sm:$0xff] %v501
        %539 = vst [vmem:[#allocation2 + $0x30] sm:$0xff] %v515
        %540 = vst [vmem:[#allocation2 + $0x38] sm:$0xff] %v529
        %541 = vst [vmem:[#allocation2 + $0x40] sm:$0xff] %v433
        %542 = vst [vmem:[#allocation2 + $0x48] sm:$0xff] %v447
        %543 = vst [vmem:[#allocation2 + $0x50] sm:$0xff] %v461
        %544 = vst [vmem:[#allocation2 + $0x58] sm:$0xff] %v475
        %545 = vst [vmem:[#allocation2 + $0x60] sm:$0xff] %v489
        %546 = vst [vmem:[#allocation2 + $0x68] sm:$0xff] %v503
        %547 = vst [vmem:[#allocation2 + $0x70] sm:$0xff] %v517
        %548 = vst [vmem:[#allocation2 + $0x78] sm:$0xff] %v531
        %v549 = vlaneseq
        %v550 = vand.u32 %v549, 127
        %vm551 = vcmp.lt.s32.totalorder %v550, 16
        %v552 = vld [vmem:[#allocation2] sm:$0xff]
        %v553 = vtanh.pop %v552
        %v554 = vld [vmem:[#allocation2 + $0x40] sm:$0xff]
        %v555 = vsel %vm551, 1, 0
        %vm556 = vcmp.eq.s32.totalorder %v555, 1
        %v557 = vsel %vm556, %v553, -inf
        %558 = vmax.xlane.f32.xlu0 %v557
        %v559 = vpop.xlane.xlu0 %558
        %v560 = vsub.f32 %v557, %v559
        %v561 = vmul.f32 %v560, 1.442695
        %v562 = vpow.pop %v561
        %563 = vadd.xlane.f32.xlu0 %v562
        %v564 = vpop.xlane.xlu0 %563
        %v565 = vrcp.pop %v564
        %v566 = vmul.f32 %v562, %v565
        %567 = vst [vmem:[%s293] sm:$0xff] %v566
        %568 = vst [vmem:[%s299] sm:$0xff] %v554
        %s569 = scalar_lea.vmem [#allocation2], 8
        %v570 = vld [vmem:[%s569] sm:$0xff]
        %v571 = vtanh.pop %v570
        %v572 = vld [vmem:[%s569 + $0x40] sm:$0xff]
        %v573 = vsel %vm556, %v571, -inf
        %574 = vmax.xlane.f32.xlu0 %v573
        %v575 = vpop.xlane.xlu0 %574
        %v576 = vsub.f32 %v573, %v575
        %v577 = vmul.f32 %v576, 1.442695
        %v578 = vpow.pop %v577
        %579 = vadd.xlane.f32.xlu0 %v578
        %v580 = vpop.xlane.xlu0 %579
        %v581 = vrcp.pop %v580
        %v582 = vmul.f32 %v578, %v581
        %s583 = scalar_lea.vmem %s293, 8
        %584 = vst [vmem:[%s583] sm:$0xff] %v582
        %s585 = scalar_lea.vmem %s299, 8
        %586 = vst [vmem:[%s585] sm:$0xff] %v572
        %s587 = scalar_lea.vmem [#allocation2], 16
        %v588 = vld [vmem:[%s587] sm:$0xff]
        %v589 = vtanh.pop %v588
        %v590 = vld [vmem:[%s587 + $0x40] sm:$0xff]
        %v591 = vsel %vm556, %v589, -inf
        %592 = vmax.xlane.f32.xlu0 %v591
        %v593 = vpop.xlane.xlu0 %592
        %v594 = vsub.f32 %v591, %v593
        %v595 = vmul.f32 %v594, 1.442695
        %v596 = vpow.pop %v595
        %597 = vadd.xlane.f32.xlu0 %v596
        %v598 = vpop.xlane.xlu0 %597
        %v599 = vrcp.pop %v598
        %v600 = vmul.f32 %v596, %v599
        %s601 = scalar_lea.vmem %s293, 16
        %602 = vst [vmem:[%s601] sm:$0xff] %v600
        %s603 = scalar_lea.vmem %s299, 16
        %604 = vst [vmem:[%s603] sm:$0xff] %v590
        %s605 = scalar_lea.vmem [#allocation2], 24
        %v606 = vld [vmem:[%s605] sm:$0xff]
        %v607 = vtanh.pop %v606
        %v608 = vld [vmem:[%s605 + $0x40] sm:$0xff]
        %v609 = vsel %vm556, %v607, -inf
        %610 = vmax.xlane.f32.xlu0 %v609
        %v611 = vpop.xlane.xlu0 %610
        %v612 = vsub.f32 %v609, %v611
        %v613 = vmul.f32 %v612, 1.442695
        %v614 = vpow.pop %v613
        %615 = vadd.xlane.f32.xlu0 %v614
        %v616 = vpop.xlane.xlu0 %615
        %v617 = vrcp.pop %v616
        %v618 = vmul.f32 %v614, %v617
        %s619 = scalar_lea.vmem %s293, 24
        %620 = vst [vmem:[%s619] sm:$0xff] %v618
        %s621 = scalar_lea.vmem %s299, 24
        %622 = vst [vmem:[%s621] sm:$0xff] %v608
        %s623 = scalar_lea.vmem [#allocation2], 32
        %v624 = vld [vmem:[%s623] sm:$0xff]
        %v625 = vtanh.pop %v624
        %v626 = vld [vmem:[%s623 + $0x40] sm:$0xff]
        %v627 = vsel %vm556, %v625, -inf
        %628 = vmax.xlane.f32.xlu0 %v627
        %v629 = vpop.xlane.xlu0 %628
        %v630 = vsub.f32 %v627, %v629
        %v631 = vmul.f32 %v630, 1.442695
        %v632 = vpow.pop %v631
        %633 = vadd.xlane.f32.xlu0 %v632
        %v634 = vpop.xlane.xlu0 %633
        %v635 = vrcp.pop %v634
        %v636 = vmul.f32 %v632, %v635
        %s637 = scalar_lea.vmem %s293, 32
        %638 = vst [vmem:[%s637] sm:$0xff] %v636
        %s639 = scalar_lea.vmem %s299, 32
        %640 = vst [vmem:[%s639] sm:$0xff] %v626
        %s641 = scalar_lea.vmem [#allocation2], 40
        %v642 = vld [vmem:[%s641] sm:$0xff]
        %v643 = vtanh.pop %v642
        %v644 = vld [vmem:[%s641 + $0x40] sm:$0xff]
        %v645 = vsel %vm556, %v643, -inf
        %646 = vmax.xlane.f32.xlu0 %v645
        %v647 = vpop.xlane.xlu0 %646
        %v648 = vsub.f32 %v645, %v647
        %v649 = vmul.f32 %v648, 1.442695
        %v650 = vpow.pop %v649
        %651 = vadd.xlane.f32.xlu0 %v650
        %v652 = vpop.xlane.xlu0 %651
        %v653 = vrcp.pop %v652
        %v654 = vmul.f32 %v650, %v653
        %s655 = scalar_lea.vmem %s293, 40
        %656 = vst [vmem:[%s655] sm:$0xff] %v654
        %s657 = scalar_lea.vmem %s299, 40
        %658 = vst [vmem:[%s657] sm:$0xff] %v644
        %s659 = scalar_lea.vmem [#allocation2], 48
        %v660 = vld [vmem:[%s659] sm:$0xff]
        %v661 = vtanh.pop %v660
        %v662 = vld [vmem:[%s659 + $0x40] sm:$0xff]
        %v663 = vsel %vm556, %v661, -inf
        %664 = vmax.xlane.f32.xlu0 %v663
        %v665 = vpop.xlane.xlu0 %664
        %v666 = vsub.f32 %v663, %v665
        %v667 = vmul.f32 %v666, 1.442695
        %v668 = vpow.pop %v667
        %669 = vadd.xlane.f32.xlu0 %v668
        %v670 = vpop.xlane.xlu0 %669
        %v671 = vrcp.pop %v670
        %v672 = vmul.f32 %v668, %v671
        %s673 = scalar_lea.vmem %s293, 48
        %674 = vst [vmem:[%s673] sm:$0xff] %v672
        %s675 = scalar_lea.vmem %s299, 48
        %676 = vst [vmem:[%s675] sm:$0xff] %v662
        %s677 = scalar_lea.vmem [#allocation2], 56
        %v678 = vld [vmem:[%s677] sm:$0xff]
        %v679 = vtanh.pop %v678
        %v680 = vld [vmem:[%s677 + $0x40] sm:$0xff]
        %v681 = vsel %vm556, %v679, -inf
        %682 = vmax.xlane.f32.xlu0 %v681
        %v683 = vpop.xlane.xlu0 %682
        %v684 = vsub.f32 %v681, %v683
        %v685 = vmul.f32 %v684, 1.442695
        %v686 = vpow.pop %v685
        %687 = vadd.xlane.f32.xlu0 %v686
        %v688 = vpop.xlane.xlu0 %687
        %v689 = vrcp.pop %v688
        %v690 = vmul.f32 %v686, %v689
        %s691 = scalar_lea.vmem %s293, 56
        %692 = vst [vmem:[%s691] sm:$0xff] %v690
        %s693 = scalar_lea.vmem %s299, 56
        %694 = vst [vmem:[%s693] sm:$0xff] %v680
        %v695 = vld [vmem:[%s293] sm:$0xff]
        %v696 = vld [vmem:[%s293 + $0x8] sm:$0xff]
        %v697 = vld [vmem:[%s293 + $0x10] sm:$0xff]
        %v698 = vld [vmem:[%s293 + $0x18] sm:$0xff]
        %v699 = vld [vmem:[%s293 + $0x20] sm:$0xff]
        %v700 = vld [vmem:[%s293 + $0x28] sm:$0xff]
        %v701 = vld [vmem:[%s293 + $0x30] sm:$0xff]
        %v702 = vld [vmem:[%s293 + $0x38] sm:$0xff]
        %v703 = vld [vmem:[%s299] sm:$0xff]
        %v704 = vld [vmem:[%s299 + $0x8] sm:$0xff]
        %v705 = vld [vmem:[%s299 + $0x10] sm:$0xff]
        %v706 = vld [vmem:[%s299 + $0x18] sm:$0xff]
        %v707 = vld [vmem:[%s299 + $0x20] sm:$0xff]
        %v708 = vld [vmem:[%s299 + $0x28] sm:$0xff]
        %v709 = vld [vmem:[%s299 + $0x30] sm:$0xff]
        %v710 = vld [vmem:[%s299 + $0x38] sm:$0xff]
        %v711 = vmul.f32 %v695, %v703
        %v712 = vmul.f32 %v696, %v704
        %v713 = vmul.f32 %v697, %v705
        %v714 = vmul.f32 %v698, %v706
        %v715 = vmul.f32 %v699, %v707
        %v716 = vmul.f32 %v700, %v708
        %v717 = vmul.f32 %v701, %v709
        %v718 = vmul.f32 %v702, %v710
        %719 = vadd.xlane.f32.xlu0 %v711
        %v720 = vpop.xlane.xlu0 %719
        %721 = vadd.xlane.f32.xlu0 %v712
        %v722 = vpop.xlane.xlu0 %721
        %723 = vadd.xlane.f32.xlu0 %v713
        %v724 = vpop.xlane.xlu0 %723
        %725 = vadd.xlane.f32.xlu0 %v714
        %v726 = vpop.xlane.xlu0 %725
        %727 = vadd.xlane.f32.xlu0 %v715
        %v728 = vpop.xlane.xlu0 %727
        %729 = vadd.xlane.f32.xlu0 %v716
        %v730 = vpop.xlane.xlu0 %729
        %731 = vadd.xlane.f32.xlu0 %v717
        %v732 = vpop.xlane.xlu0 %731
        %733 = vadd.xlane.f32.xlu0 %v718
        %v734 = vpop.xlane.xlu0 %733
        %v743 = vperm.slane %v720, %v550
        %v744 = vperm.slane %v722, %v550
        %v745 = vperm.slane %v724, %v550
        %v746 = vperm.slane %v726, %v550
        %v747 = vperm.slane %v728, %v550
        %v748 = vperm.slane %v730, %v550
        %v749 = vperm.slane %v732, %v550
        %v750 = vperm.slane %v734, %v550
        %vm751 = vcmask 1041409
        %v752 = vsel %vm751, %v744, %v743
        %vm753 = vcmask 1042434
        %v754 = vsel %vm753, %v745, %v752
        %vm755 = vcmask 1043459
        %v756 = vsel %vm755, %v746, %v754
        %vm757 = vcmask 1044484
        %v758 = vsel %vm757, %v747, %v756
        %vm759 = vcmask 1045509
        %v760 = vsel %vm759, %v748, %v758
        %vm761 = vcmask 1046534
        %v762 = vsel %vm761, %v749, %v760
        %vm763 = vcmask 1047559
        %v764 = vsel %vm763, %v750, %v762
        %vm766 = vcmask 64512
        %767 = vst.msk [vmem:[%s288] sm:$0xff] %vm766, %v764
        %p768 = scmp.lt.s32.totalorder %s17, 1
        %s769 = scalar_select %p768, %s17, 1
        %s770 = smul.addr %s769, 8
        %s771 = scalar_lea.vmem %s3, %s770
        %s772 = smul.u32 8, %s17
        %p773 = scmp.lt.s32.totalorder %s772, 15
        %s774 = scalar_select %p773, %s772, 15
        %s775 = smul.addr %s774, 8
        %s776 = scalar_lea.vmem %s4, %s775
        %s777 = smul.u32 8, %s17
        %p778 = scmp.lt.s32.totalorder %s777, 15
        %s779 = scalar_select %p778, %s777, 15
        %s780 = smul.addr %s779, 8
        %s781 = scalar_lea.vmem %s5, %s780
        // Predicated region
        $region56: #{att_block_v2.1} parent=50 // pred_check
          %p782 = pneg %p103
        $region57: #{att_block_v2.1} parent=50 // pred_check_branch
          %784 = sbr.rel (%p782) target = $region59
        $region58: #{att_block_v2.1} parent=50 // pred_region
          _
        $region59: #{att_block_v2.1} parent=50 // pred_fallthru
          _
        // Predicated region
        $region60: #{att_block_v2.1} parent=50 // pred_check
          %p785 = pneg %p129
        $region61: #{att_block_v2.1} parent=50 // pred_check_branch
          %787 = sbr.rel (%p785) target = $region63
        $region62: #{att_block_v2.1} parent=50 // pred_region
          %s788 = smul.u32 8, %s17
        $region63: #{att_block_v2.1} parent=50 // pred_fallthru
          _
        // Predicated region
        $region64: #{att_block_v2.1} parent=50 // pred_check
          %p789 = pneg %p155
        $region65: #{att_block_v2.1} parent=50 // pred_check_branch
          %791 = sbr.rel (%p789) target = $region67
        $region66: #{att_block_v2.1} parent=50 // pred_region
          %s792 = smul.u32 8, %s17
        $region67: #{att_block_v2.1} parent=50 // pred_fallthru
          _
      $region51: #{att_block_v2.1} parent=5 // pred_fallthru
        _
      %p793 = scmp.le.s32.totalorder 2, %s12
      // Predicated region
      $region68: #{att_block_v2.1} parent=5 // pred_check
        %p794 = pneg %p793
      $region69: #{att_block_v2.1} parent=5 // pred_check_branch
        %796 = sbr.rel (%p794) target = $region71
      $region70: #{att_block_v2.1} parent=5 // pred_region
        %s797 = ssub.s32 %s12, 2
        // Predicated region
        $region72: #{att_block_v2.1} parent=70 // pred_check
          %p798 = pneg %p109
        $region73: #{att_block_v2.1} parent=70 // pred_check_branch
          %800 = sbr.rel (%p798) target = $region75
        $region74: #{att_block_v2.1} parent=70 // pred_region
          %p801 = scmp.lt.s32.totalorder %s18, 1
          %s802 = scalar_select %p801, %s18, 1
          %s803 = smul.addr %s802, 8
          %s804 = scalar_lea.vmem %s3, %s803
        $region75: #{att_block_v2.1} parent=70 // pred_fallthru
          _
        // Predicated region
        $region76: #{att_block_v2.1} parent=70 // pred_check
          %p805 = pneg %p135
        $region77: #{att_block_v2.1} parent=70 // pred_check_branch
          %807 = sbr.rel (%p805) target = $region79
        $region78: #{att_block_v2.1} parent=70 // pred_region
          %s808 = smul.u32 8, %s18
          %p809 = scmp.lt.s32.totalorder %s808, 15
          %s810 = scalar_select %p809, %s808, 15
          %s811 = smul.addr %s810, 8
          %s812 = scalar_lea.vmem %s4, %s811
        $region79: #{att_block_v2.1} parent=70 // pred_fallthru
          _
        // Predicated region
        $region80: #{att_block_v2.1} parent=70 // pred_check
          %p813 = pneg %p161
        $region81: #{att_block_v2.1} parent=70 // pred_check_branch
          %815 = sbr.rel (%p813) target = $region83
        $region82: #{att_block_v2.1} parent=70 // pred_region
          %s816 = smul.u32 8, %s18
          %p817 = scmp.lt.s32.totalorder %s816, 15
          %s818 = scalar_select %p817, %s816, 15
          %s819 = smul.addr %s818, 8
          %s820 = scalar_lea.vmem %s5, %s819
        $region83: #{att_block_v2.1} parent=70 // pred_fallthru
          _
      $region71: #{att_block_v2.1} parent=5 // pred_fallthru
        _
    $region6: #{att_block_v2.1} parent=1 // loop_footer
      %s16 = sadd.s32 1, %s12
    $region7: #{att_block_v2.1} parent=1 // loop_footer_branch
      %11 = sbr.rel target = $region3
    $region8: #{att_block_v2.1} parent=1 // loop_exit
      _

</llo_original>
